<compile_context>
chip_gen: v7x
topology: tpu7x:2x2x1
jax: 0.10.0
libtpu: 0.0.40
codegen_flags: <defaults>
</compile_context>

<pallas_src>
import functools
import math

import jax
import jax.numpy as jnp
from jax import lax
from jax.experimental import pallas as pl
from jax.experimental.pallas import tpu as pltpu

_LN10000 = math.log(10000.0)
_HALF_PI = math.pi / 2.0


# ----------------------------------------------------------------- buffers --
def make_positional_encoding_table(d_model: int, max_len: int = 5000,
                                   dtype=jnp.float32):
    """Deterministic pe buffer, identical to the PyTorch __init__ (plain JAX)."""
    assert d_model % 2 == 0, "reference pe construction assumes even d_model"
    position = jnp.arange(0, max_len, dtype=jnp.float32)[:, None]        # (L,1)
    div_term = jnp.exp(jnp.arange(0, d_model, 2, dtype=jnp.float32)
                       * (-_LN10000 / max_len))                          # (D/2,)
    pe = jnp.zeros((max_len, d_model), jnp.float32)
    pe = pe.at[:, 0::2].set(jnp.sin(position * div_term))
    pe = pe.at[:, 1::2].set(jnp.cos(position * div_term))
    return pe.astype(dtype)                                              # (L,D)


# ----------------------------------------------------------------- kernels --
def _pe_add_table_kernel(x_ref, pe_ref, o_ref):
    # Fallback path: pe tile streamed from HBM.  f32 accumulate, cast on store.
    o_ref[...] = (x_ref[...].astype(jnp.float32)
                  + pe_ref[...].astype(jnp.float32)).astype(o_ref.dtype)


def _pe_add_gen_kernel(x_ref, o_ref, *, d_model, max_len, flattened):
    # Primary path: pe computed on the fly (no pe HBM traffic).
    # x_ref / o_ref: (tile_r, width) tile of one batch element (batch squeezed).
    tile_r, width = x_ref.shape
    s = pl.program_id(0)                                   # seq-tile index
    r = lax.broadcasted_iota(jnp.int32, (tile_r, width), 0).astype(jnp.float32)
    c = lax.broadcasted_iota(jnp.int32, (tile_r, width), 1).astype(jnp.float32)
    if flattened:
        # global flat index = (s*tile_r + r)*width + c ; decompose into
        # (pos, feat) with a float div + one-step correction (exact for our
        # magnitudes: flat < 2^24, so all products/subtractions are exact).
        base = (s * (tile_r * width)).astype(jnp.float32)
        idx = base + r * float(width) + c
        q0 = jnp.floor(idx / float(d_model))
        f0 = idx - q0 * float(d_model)
        q = q0 + jnp.where(f0 >= float(d_model), 1.0, 0.0) \
               - jnp.where(f0 < 0.0, 1.0, 0.0)
        pos = q
        feat = idx - q * float(d_model)
    else:
        pos = (s * tile_r).astype(jnp.float32) + r
        feat = c
    half = jnp.floor(feat * 0.5)                           # i  = feat // 2
    is_odd = feat - 2.0 * half                             # feat % 2 in {0,1}
    angle = pos * jnp.exp(half * (-2.0 * _LN10000 / float(max_len)))
    # even feat -> sin(angle) == cos(angle - pi/2); odd feat -> cos(angle).
    # One transcendental per element instead of sin+cos+select (EUP slot).
    pe = jnp.cos(angle - (1.0 - is_odd) * _HALF_PI)
    o_ref[...] = (x_ref[...].astype(jnp.float32) + pe).astype(o_ref.dtype)


# -------------------------------------------- capability probe (in-kernel pe)
_GEN_OK = None


def _gen_supported():
    """One-time probe: do iota/floor/exp/sin/cos/where lower & match XLA?"""
    global _GEN_OK
    if _GEN_OK is not None:
        return _GEN_OK
    try:
        def probe(o_ref):
            r = lax.broadcasted_iota(jnp.int32, (8, 128), 0).astype(jnp.float32)
            c = lax.broadcasted_iota(jnp.int32, (8, 128), 1).astype(jnp.float32)
            idx = r * 128.0 + c
            q = jnp.floor(idx / 20.0)
            f = idx - q * 20.0
            ang = q * jnp.exp(f * (-1e-3))
            o_ref[...] = jnp.where(f - 2.0 * jnp.floor(f * 0.5) > 0.5,
                                   jnp.cos(ang), jnp.sin(ang))

        got = jax.block_until_ready(pl.pallas_call(
            probe, out_shape=jax.ShapeDtypeStruct((8, 128), jnp.float32))())
        idx = jnp.arange(8 * 128, dtype=jnp.float32).reshape(8, 128)
        q = jnp.floor(idx / 20.0)
        f = idx - q * 20.0
        ang = q * jnp.exp(f * (-1e-3))
        want = jnp.where(f - 2.0 * jnp.floor(f * 0.5) > 0.5,
                         jnp.cos(ang), jnp.sin(ang))
        _GEN_OK = bool(jnp.max(jnp.abs(got - want)) < 1e-3)
    except Exception:
        _GEN_OK = False
    return _GEN_OK


# ------------------------------------------------------------------ tiling --
def _vmem_plan():
    """(target pipelined footprint, vmem_limit_bytes) sized per chip generation.

    v5e/v6e report 128 MiB VMEM -> 64 MiB footprint / 96 MiB limit;
    v7x reports 64 MiB per core -> 32 MiB footprint / 48 MiB limit.
    Falls back to the v7x numbers (safe everywhere) if the query fails.
    """
    try:
        cap = int(pltpu.get_tpu_info().vmem_capacity_bytes)
    except Exception:
        cap = 64 << 20
    footprint = max(8 << 20, min(cap // 2, 80 << 20))
    limit = max(32 << 20, min((cap * 3) // 4, 100 << 20))
    return footprint, limit


def _pick_tile_rows(rows, width, itemsize, sub, n_other_programs, tile_bytes):
    if rows <= sub:
        return rows                                 # block == full dim (tiny)
    max_r = max(sub, tile_bytes // (width * itemsize))
    tile_r = max(sub, (min(rows, max_r) // sub) * sub)
    # v7x megacore: make sure the grid has at least 2 programs when possible.
    if n_other_programs * pl.cdiv(rows, tile_r) < 2 and rows >= 2 * sub:
        half = -(-rows // 2)
        tile_r = min(tile_r, ((half + sub - 1) // sub) * sub)
    # Prefer a tile that evenly divides rows (avoid a mostly-masked edge tile),
    # but don't shrink the tile by more than 2x for it.
    if rows % tile_r:
        t = tile_r - sub
        while t >= max(sub, tile_r // 2):
            if rows % t == 0:
                tile_r = t
                break
            t -= sub
    return tile_r


# ----------------------------------------------------------------- forward --
def positional_encoding_forward(x, pe_table):
    """
    x:        (bs, seqlen, d_model)
    pe_table: (max_len, d_model), max_len >= seqlen (the module's buffer; only
              read on the fallback path — the primary path regenerates pe
              in-kernel).
    returns   dropout_eval(x + pe_table[None, :seqlen, :])  (same shape/dtype as x)
    """
    bs, seqlen, d_model = x.shape
    max_len = pe_table.shape[0]
    assert pe_table.shape[1] == d_model and max_len >= seqlen
    assert d_model % 2 == 0, "reference pe construction assumes even d_model"

    use_gen = _gen_supported()

    itemsize = jnp.dtype(x.dtype).itemsize
    sub = max(8, 32 // itemsize)            # sublane multiple: 8/16/32 for 4/2/1B

    flat = seqlen * d_model
    if d_model % 128 == 0:
        # Already lane-dense: straight 3-D row tiling, no repack.
        layout_flat = False
        rows, width = seqlen, d_model
        x_k = x
        pad = 0
    else:
        # Repack (seqlen, d_model) -> (rows, 128) so every store is an
        # unmasked full-lane vst; pad the flat axis to a multiple of 128 if
        # needed (few elements, sliced back off below).
        layout_flat = True
        width = 128
        pad = (-flat) % 128
        rows = (flat + pad) // 128
        x2 = x.reshape(bs, flat)
        if pad:
            x2 = jnp.pad(x2, ((0, 0), (0, pad)))
        x_k = x2.reshape(bs, rows, width)

    footprint, vmem_limit = _vmem_plan()
    n_bufs = 4 if use_gen else 6            # double-buffered x/out (+ pe)
    tile_bytes = max(1 << 20, footprint // n_bufs)
    tile_r = _pick_tile_rows(rows, width, itemsize, sub, bs, tile_bytes)
    n_seq_tiles = pl.cdiv(rows, tile_r)
    grid = (n_seq_tiles, bs)                # batch innermost

    x_spec = pl.BlockSpec((None, tile_r, width), lambda s, b: (b, s, 0))
    out_spec = pl.BlockSpec((None, tile_r, width), lambda s, b: (b, s, 0))
    out_shape = jax.ShapeDtypeStruct((bs, rows, width), x.dtype)
    cparams = pltpu.CompilerParams(
        dimension_semantics=("parallel", "parallel"),
        vmem_limit_bytes=int(vmem_limit))

    if use_gen:
        kernel = functools.partial(_pe_add_gen_kernel, d_model=d_model,
                                   max_len=max_len, flattened=layout_flat)
        out = pl.pallas_call(
            kernel,
            out_shape=out_shape,
            grid_spec=pltpu.PrefetchScalarGridSpec(
                num_scalar_prefetch=0, grid=grid,
                in_specs=[x_spec], out_specs=out_spec),
            compiler_params=cparams,
        )(x_k)
    else:
        # Fallback: stream pe tiles from HBM (index selected by the BlockSpec,
        # re-fetched only once per seq tile thanks to the innermost batch axis).
        if layout_flat:
            pe2 = pe_table[:seqlen].reshape(flat)
            if pad:
                pe2 = jnp.pad(pe2, (0, pad))
            pe_k = pe2.reshape(rows, width)
        else:
            pe_k = pe_table
        if tile_r % 8 != 0:                  # tiny case: block must == full dims
            pe_k = pe_k[:tile_r]
        pe_spec = pl.BlockSpec((tile_r, width), lambda s, b: (s, 0))
        out = pl.pallas_call(
            _pe_add_table_kernel,
            out_shape=out_shape,
            grid_spec=pltpu.PrefetchScalarGridSpec(
                num_scalar_prefetch=0, grid=grid,
                in_specs=[x_spec, pe_spec], out_specs=out_spec),
            compiler_params=cparams,
        )(x_k, pe_k)

    if layout_flat:
        out = out.reshape(bs, rows * width)[:, :flat].reshape(bs, seqlen, d_model)
    return out


# -------------------------------------------------------------------- main --
if __name__ == "__main__":
    key = jax.random.PRNGKey(0)
    k1, k2, k3 = jax.random.split(key, 3)

    # Case 1: small d_model (<128), flat % 128 == 0 -> flattened lane-dense path
    bs, seqlen, d_model = 2, 8, 32
    pe = make_positional_encoding_table(d_model, max_len=5000)
    x = jax.random.normal(k1, (bs, seqlen, d_model), dtype=jnp.float32)
    out = jax.block_until_ready(positional_encoding_forward(x, pe))
    ref = x + pe[None, :seqlen, :]
    assert out.shape == ref.shape and out.dtype == ref.dtype
    assert jnp.allclose(out, ref, atol=1e-4, rtol=1e-4), \
        float(jnp.max(jnp.abs(out - ref)))

    # Case 2: lane-dense d_model (multiple of 128) -> row-tiled 3-D path
    bs2, seqlen2, d_model2 = 2, 128, 256
    pe2 = make_positional_encoding_table(d_model2, max_len=5000)
    x2 = jax.random.normal(k2, (bs2, seqlen2, d_model2), dtype=jnp.float32)
    out2 = jax.block_until_ready(positional_encoding_forward(x2, pe2))
    ref2 = x2 + pe2[None, :seqlen2, :]
    assert jnp.allclose(out2, ref2, atol=1e-4, rtol=1e-4), \
        float(jnp.max(jnp.abs(out2 - ref2)))

    # Case 3: awkward shape (flat % 128 != 0) -> padded flattened path
    bs3, seqlen3, d_model3 = 2, 7, 20
    pe3 = make_positional_encoding_table(d_model3, max_len=5000)
    x3 = jax.random.normal(k3, (bs3, seqlen3, d_model3), dtype=jnp.float32)
    out3 = jax.block_until_ready(positional_encoding_forward(x3, pe3))
    ref3 = x3 + pe3[None, :seqlen3, :]
    assert jnp.allclose(out3, ref3, atol=1e-4, rtol=1e-4), \
        float(jnp.max(jnp.abs(out3 - ref3)))

    print("KERNEL_OK")
</pallas_src>

<mosaic_0001>
module attributes {stable_mosaic.version = 11 : i64} {
  func.func @_pe_add_table_kernel(%arg0: i32, %arg1: i32, %arg2: memref<1x2x128xf32, #tpu.memory_space<vmem>>, %arg3: memref<2x128xf32, #tpu.memory_space<vmem>>, %arg4: memref<1x2x128xf32, #tpu.memory_space<vmem>>) attributes {dimension_semantics = [#tpu.dimension_semantics<parallel>, #tpu.dimension_semantics<parallel>], iteration_bounds = array<i64: 1, 2>, scalar_prefetch = 0 : i64, scratch_operands = 0 : i64, tpu.core_type = #tpu.core_type<tc>, window_params = [{transform_indices = @transform_0, window_bounds = array<i64: 1, 2, 128>}, {transform_indices = @transform_1, window_bounds = array<i64: 2, 128>}, {transform_indices = @transform_2, window_bounds = array<i64: 1, 2, 128>}]} {
    %c0 = arith.constant 0 : index
    %c0_0 = arith.constant 0 : index
    %c0_1 = arith.constant 0 : index
    %0 = vector.load %arg2[%c0, %c0_0, %c0_1] : memref<1x2x128xf32, #tpu.memory_space<vmem>>, vector<1x2x128xf32>
    %1 = vector.shape_cast %0 : vector<1x2x128xf32> to vector<2x128xf32>
    %c0_2 = arith.constant 0 : index
    %c0_3 = arith.constant 0 : index
    %2 = vector.load %arg3[%c0_2, %c0_3] : memref<2x128xf32, #tpu.memory_space<vmem>>, vector<2x128xf32>
    %3 = arith.addf %1, %2 : vector<2x128xf32>
    %c0_4 = arith.constant 0 : index
    %c0_5 = arith.constant 0 : index
    %c0_6 = arith.constant 0 : index
    %4 = vector.load %arg4[%c0_4, %c0_5, %c0_6] : memref<1x2x128xf32, #tpu.memory_space<vmem>>, vector<1x2x128xf32>
    %5 = vector.shape_cast %4 : vector<1x2x128xf32> to vector<2x128xf32>
    %6 = vector.shape_cast %3 : vector<2x128xf32> to vector<1x2x128xf32>
    tpu.vector_store %arg4[%c0_4, %c0_5, %c0_6], %6 {strides = array<i32>} : memref<1x2x128xf32, #tpu.memory_space<vmem>>, vector<1x2x128xf32>,
    return
  }
  func.func @transform_0(%arg0: i32, %arg1: i32) -> (i32, i32, i32) {
    %c0_i32 = arith.constant 0 : i32
    %c0_i32_0 = arith.constant 0 : i32
    return %arg1, %arg0, %c0_i32 : i32, i32, i32
  }
  func.func @transform_1(%arg0: i32, %arg1: i32) -> (i32, i32) {
    %c0_i32 = arith.constant 0 : i32
    %c0_i32_0 = arith.constant 0 : i32
    return %arg0, %c0_i32 : i32, i32
  }
  func.func @transform_2(%arg0: i32, %arg1: i32) -> (i32, i32, i32) {
    %c0_i32 = arith.constant 0 : i32
    %c0_i32_0 = arith.constant 0 : i32
    return %arg1, %arg0, %c0_i32 : i32, i32, i32
  }
}

</mosaic_0001>

<llo_original>
// kernel: tpu_custom_call.1
$region0: #{tpu_custom_call.1}
  #allocation0 [shape = 'u32[]', space=smem, size = 0x4, offset = 0x4, fixed_abs, tag = 'smem constant byte address 0x4 - core index']
  #allocation1 [shape = 'u32[144,128]{1,0:T(1,128)}', space=vmem, size = 0x12000, scoped, tag = 'internal scratch']
  %s0 = inlined_call_operand.hbm [shape: f32[2,2,128], index: 0, kind: input, shape index: {}]
  %s1 = inlined_call_operand.vmem [shape: f32[2,128], index: 1, kind: input, shape index: {}]
  %s2 = inlined_call_operand.hbm [shape: f32[2,2,128], index: 2, kind: output, shape index: {}]
  %s3 = sld [smem:[#allocation0]]
  $region45: #{tpu_custom_call.1} parent=0
    _
  %s5 = ssub.s32 1, %s3
  %s6 = scalar_select 0, %s5, %s3
  $region1: #{tpu_custom_call.1} parent=0
    #allocation2 [shape = 'u8[2048]{0}', space=vmem, size = 0x800, scoped, tag = 'input window, operand 0']
    #allocation3 [shape = 's32[2]{0}', space=sflag, size = 0x8, scoped, tag = 'scoped memory for tpu_custom_call.1']
    #allocation4 [shape = 's32[2]{0}', space=sflag, size = 0x8, scoped, tag = 'scoped memory for tpu_custom_call.1']
    #allocation5 [shape = 'u8[2048]{0}', space=vmem, size = 0x800, scoped, tag = 'output window, operand 0']
    %7 = vsyncpa [#allocation3], 0
    %s8 = scalar_lea.sflag [#allocation3], 1
    %9 = vsyncpa %s8, 0
    %10 = vsyncpa [#allocation4], 0
    %s11 = scalar_lea.sflag [#allocation4], 1
    %12 = vsyncpa %s11, 0
    loop: start=0, step=1, limit=4
    $region2: #{tpu_custom_call.1} parent=1 // loop_pre_header
      _
    $region3: #{tpu_custom_call.1} parent=1 // loop_header
      %s14 = sphi 0, %s18
      %p15 = scmp.ge.s32.totalorder %s14, 4
      %s21 = sphi 0, %s33
      %s22 = sphi 0, %s29
      %s23 = sphi 0, %s21
      %s24 = sphi 0, %s22
      %s25 = sphi 0, %s23
      %s26 = sphi 0, %s24
      %s38 = sphi 0, %s40
      %s41 = sphi 0, %s38
      %s42 = sphi 0, %s41
      %s58 = sphi 0, %s42
      %s64 = sphi 0, %s66
      %s67 = sphi 0, %s64
      %s68 = sphi 0, %s67
      %s84 = sphi 0, %s68
      %s92 = sphi 0, %s94
      %s95 = sphi 0, %s92
      %s96 = sphi 0, %s95
      %s112 = sphi 0, %s96
    $region4: #{tpu_custom_call.1} parent=1 // loop_header_branch
      %17 = sbr.rel (%p15) target = $region8
    $region5: #{tpu_custom_call.1} parent=1 // loop_body
      %s19 = ssub.s32 %s14, 1
      %s20 = ssub.s32 %s14, 2
      %s27 = sadd.s32 1, %s22
      %p28 = scmp.ge.s32.totalorder %s27, 2
      %s29 = scalar_select %p28, 0, %s27
      %s30 = sadd.s32 1, %s21
      %s31 = scalar_select %p28, %s30, %s21
      %p32 = scmp.ge.s32.totalorder %s31, 1
      %s33 = scalar_select %p32, 0, %s31
      %s34 = ssub.s32 %s22, %s29
      %s35 = ssub.s32 %s21, %s33
      %s36 = sor.u32 %s34, %s35
      %p37 = scmp.eq.s32.totalorder %s36, 0
      %s39 = sadd.s32 %s38, 1
      %s40 = scalar_select %p37, %s38, %s39
      %p43 = pneg %p37
      %p44 = scmp.eq.s32.totalorder %s14, 1
      %p45 = por %p43, %p44
      %p46 = scmp.ne.s32.totalorder %s38, %s41
      %p47 = scmp.eq.s32.totalorder %s14, 0
      %p48 = por %p46, %p47
      %p49 = scmp.ne.s32.totalorder %s38, %s41
      %p50 = scmp.eq.s32.totalorder %s19, 1
      %p51 = por %p49, %p50
      %p52 = scmp.ne.s32.totalorder %s41, %s42
      %p53 = scmp.eq.s32.totalorder %s19, 0
      %p54 = por %p52, %p53
      %p55 = scmp.ne.s32.totalorder %s41, %s42
      %p56 = scmp.eq.s32.totalorder %s20, 1
      %p57 = por %p55, %p56
      %p59 = scmp.ne.s32.totalorder %s42, %s58
      %p60 = scmp.eq.s32.totalorder %s20, 0
      %p61 = por %p59, %p60
      %s62 = ssub.s32 %s21, %s33
      %p63 = scmp.eq.s32.totalorder %s62, 0
      %s65 = sadd.s32 %s64, 1
      %s66 = scalar_select %p63, %s64, %s65
      %p69 = pneg %p63
      %p70 = scmp.eq.s32.totalorder %s14, 1
      %p71 = por %p69, %p70
      %p72 = scmp.ne.s32.totalorder %s64, %s67
      %p73 = scmp.eq.s32.totalorder %s14, 0
      %p74 = por %p72, %p73
      %p75 = scmp.ne.s32.totalorder %s64, %s67
      %p76 = scmp.eq.s32.totalorder %s19, 1
      %p77 = por %p75, %p76
      %p78 = scmp.ne.s32.totalorder %s67, %s68
      %p79 = scmp.eq.s32.totalorder %s19, 0
      %p80 = por %p78, %p79
      %p81 = scmp.ne.s32.totalorder %s67, %s68
      %p82 = scmp.eq.s32.totalorder %s20, 1
      %p83 = por %p81, %p82
      %p85 = scmp.ne.s32.totalorder %s68, %s84
      %p86 = scmp.eq.s32.totalorder %s20, 0
      %p87 = por %p85, %p86
      %s88 = ssub.s32 %s22, %s29
      %s89 = ssub.s32 %s21, %s33
      %s90 = sor.u32 %s88, %s89
      %p91 = scmp.eq.s32.totalorder %s90, 0
      %s93 = sadd.s32 %s92, 1
      %s94 = scalar_select %p91, %s92, %s93
      %p97 = pneg %p91
      %p98 = scmp.eq.s32.totalorder %s14, 1
      %p99 = por %p97, %p98
      %p100 = scmp.ne.s32.totalorder %s92, %s95
      %p101 = scmp.eq.s32.totalorder %s14, 0
      %p102 = por %p100, %p101
      %p103 = scmp.ne.s32.totalorder %s92, %s95
      %p104 = scmp.eq.s32.totalorder %s19, 1
      %p105 = por %p103, %p104
      %p106 = scmp.ne.s32.totalorder %s95, %s96
      %p107 = scmp.eq.s32.totalorder %s19, 0
      %p108 = por %p106, %p107
      %p109 = scmp.ne.s32.totalorder %s95, %s96
      %p110 = scmp.eq.s32.totalorder %s20, 1
      %p111 = por %p109, %p110
      %p113 = scmp.ne.s32.totalorder %s96, %s112
      %p114 = scmp.eq.s32.totalorder %s20, 0
      %p115 = por %p113, %p114
      %p116 = scmp.le.s32.totalorder 1, %s14
      %p117 = scmp.lt.s32.totalorder %s14, 3
      %p118 = pnand %p116, %p117
      %p119 = pneg %p118
      // Predicated region
      $region9: #{tpu_custom_call.1} parent=5 // pred_check
        _
      $region10: #{tpu_custom_call.1} parent=5 // pred_check_branch
        %121 = sbr.rel (%p118) target = $region12
      $region11: #{tpu_custom_call.1} parent=5 // pred_region
        %s122 = ssub.s32 %s14, 1
        // Predicated region
        $region13: #{tpu_custom_call.1} parent=11 // pred_check
          %p123 = pneg %p80
        $region14: #{tpu_custom_call.1} parent=11 // pred_check_branch
          %125 = sbr.rel (%p123) target = $region16
        $region15: #{tpu_custom_call.1} parent=11 // pred_region
          %p126 = scmp.lt.s32.totalorder %s23, 0
          %s127 = scalar_select %p126, %s23, 0
          %s128 = smul.addr %s127, 2
          %s129 = scalar_lea.vmem %s1, %s128
        $region16: #{tpu_custom_call.1} parent=11 // pred_fallthru
          _
      $region12: #{tpu_custom_call.1} parent=5 // pred_fallthru
        _
      %p130 = scmp.lt.s32.totalorder %s14, 2
      // Predicated region
      $region17: #{tpu_custom_call.1} parent=5 // pred_check
        %p131 = pneg %p130
      $region18: #{tpu_custom_call.1} parent=5 // pred_check_branch
        %133 = sbr.rel (%p131) target = $region20
      $region19: #{tpu_custom_call.1} parent=5 // pred_region
        // Predicated region
        $region21: #{tpu_custom_call.1} parent=19 // pred_check
          %p134 = pneg %p48
        $region22: #{tpu_custom_call.1} parent=19 // pred_check_branch
          %136 = sbr.rel (%p134) target = $region24
        $region23: #{tpu_custom_call.1} parent=19 // pred_region
          %s137 = sand.u32 %s38, 1
          %s138 = scalar_lea.sflag [#allocation3], %s137
          %s139 = sand.u32 %s38, 1
          %s140 = smul.addr %s139, 2
          %s141 = scalar_lea.vmem [#allocation2], %s140
          %s143 = ssub.s32 32, 32
          %144 = vsyncadd %s138, %s143
          %s145 = sadd.s32 %s21, %s22
          %s146 = smul.addr %s145, 32
          %s147 = scalar_lea.hbm %s0, %s146
          %s149 = sshll.u32 %s141, 4
          %s150 = int_to_ptr.vmem [resolvable:$true] %s149
          %152 = dma.hbm_to_vmem [thread:$0]  %s147, 32, %s150, %s138
        $region24: #{tpu_custom_call.1} parent=19 // pred_fallthru
          _
      $region20: #{tpu_custom_call.1} parent=5 // pred_fallthru
        _
      %p153 = scmp.le.s32.totalorder 1, %s14
      %p154 = scmp.lt.s32.totalorder %s14, 3
      %p155 = pnand %p153, %p154
      %p156 = pneg %p155
      // Predicated region
      $region25: #{tpu_custom_call.1} parent=5 // pred_check
        _
      $region26: #{tpu_custom_call.1} parent=5 // pred_check_branch
        %158 = sbr.rel (%p155) target = $region28
      $region27: #{tpu_custom_call.1} parent=5 // pred_region
        %s159 = ssub.s32 %s14, 1
        %s160 = sand.u32 %s41, 1
        %s161 = scalar_lea.sflag [#allocation3], %s160
        %s162 = sand.u32 %s41, 1
        %s163 = smul.addr %s162, 2
        %s164 = scalar_lea.vmem [#allocation2], %s163
        // Predicated region
        $region29: #{tpu_custom_call.1} parent=27 // pred_check
          %p165 = pneg %p54
        $region30: #{tpu_custom_call.1} parent=27 // pred_check_branch
          %167 = sbr.rel (%p165) target = $region32
        $region31: #{tpu_custom_call.1} parent=27 // pred_region
          %168 = dma.done %s161, 32
        $region32: #{tpu_custom_call.1} parent=27 // pred_fallthru
          _
        %s169 = sand.u32 %s41, 1
        %s170 = scalar_lea.sflag [#allocation3], %s169
        %s171 = sand.u32 %s41, 1
        %s172 = smul.addr %s171, 2
        %s173 = scalar_lea.vmem [#allocation2], %s172
        %p174 = pneg %p54
        %p175 = pneg %p51
        %p176 = scmp.lt.s32.totalorder %s23, 0
        %s177 = scalar_select %p176, %s23, 0
        %s178 = smul.addr %s177, 2
        %s179 = scalar_lea.vmem %s1, %s178
        %p180 = pneg %p80
        %p181 = pneg %p77
        %p182 = pneg %p108
        %p183 = pneg %p105
        %s184 = sand.u32 %s95, 1
        %s185 = scalar_lea.sflag [#allocation4], %s184
        %s186 = sand.u32 %s95, 1
        %s187 = smul.addr %s186, 2
        %s188 = scalar_lea.vmem [#allocation5], %s187
        %p189 = scmp.lt.s32.totalorder %s23, 0
        %s190 = scalar_select %p189, %s23, 0
        %s191 = smul.addr %s190, 2
        %s192 = scalar_lea.vmem %s1, %s191
        %v193 = vld [vmem:[%s164] sm:$0x3]
        %v194 = vld [vmem:[%s192] sm:$0x3]
        %v195 = vadd.f32 %v193, %v194
        %196 = vst [vmem:[%s188] sm:$0x3] %v195
        %s197 = sand.u32 %s95, 1
        %s198 = scalar_lea.sflag [#allocation4], %s197
        %s199 = sand.u32 %s95, 1
        %s200 = smul.addr %s199, 2
        %s201 = scalar_lea.vmem [#allocation5], %s200
        // Predicated region
        $region33: #{tpu_custom_call.1} parent=27 // pred_check
          %p202 = pneg %p105
        $region34: #{tpu_custom_call.1} parent=27 // pred_check_branch
          %204 = sbr.rel (%p202) target = $region36
        $region35: #{tpu_custom_call.1} parent=27 // pred_region
          %s206 = ssub.s32 32, 32
          %207 = vsyncadd %s198, %s206
          %s208 = sadd.s32 %s23, %s24
          %s209 = smul.addr %s208, 32
          %s210 = scalar_lea.hbm %s2, %s209
          %s212 = sshll.u32 %s201, 4
          %s213 = int_to_ptr.vmem [resolvable:$true] %s212
          %215 = dma.vmem_to_hbm [thread:$0]  %s213, 32, %s210, %s198
        $region36: #{tpu_custom_call.1} parent=27 // pred_fallthru
          _
      $region28: #{tpu_custom_call.1} parent=5 // pred_fallthru
        _
      %p216 = scmp.le.s32.totalorder 2, %s14
      // Predicated region
      $region37: #{tpu_custom_call.1} parent=5 // pred_check
        %p217 = pneg %p216
      $region38: #{tpu_custom_call.1} parent=5 // pred_check_branch
        %219 = sbr.rel (%p217) target = $region40
      $region39: #{tpu_custom_call.1} parent=5 // pred_region
        %s220 = ssub.s32 %s14, 2
        // Predicated region
        $region41: #{tpu_custom_call.1} parent=39 // pred_check
          %p221 = pneg %p111
        $region42: #{tpu_custom_call.1} parent=39 // pred_check_branch
          %223 = sbr.rel (%p221) target = $region44
        $region43: #{tpu_custom_call.1} parent=39 // pred_region
          %s224 = sand.u32 %s96, 1
          %s225 = scalar_lea.sflag [#allocation4], %s224
          %s226 = sand.u32 %s96, 1
          %s227 = smul.addr %s226, 2
          %s228 = scalar_lea.vmem [#allocation5], %s227
          %229 = dma.done %s225, 32
        $region44: #{tpu_custom_call.1} parent=39 // pred_fallthru
          _
      $region40: #{tpu_custom_call.1} parent=5 // pred_fallthru
        _
    $region6: #{tpu_custom_call.1} parent=1 // loop_footer
      %s18 = sadd.s32 1, %s14
    $region7: #{tpu_custom_call.1} parent=1 // loop_footer_branch
      %13 = sbr.rel target = $region3
    $region8: #{tpu_custom_call.1} parent=1 // loop_exit
      _
    %230 = vsyncpa [#allocation3], 1
    %s231 = scalar_lea.sflag [#allocation3], 1
    %232 = vsyncpa %s231, 1
    %233 = vsyncpa [#allocation4], 1
    %s234 = scalar_lea.sflag [#allocation4], 1
    %235 = vsyncpa %s234, 1

</llo_original>
